<compile_context>
chip_gen: v6e
topology: v6e:2x2x1
jax: 0.10.0
libtpu: 0.0.40
codegen_flags: <defaults>
</compile_context>

<pallas_src>
import functools

import jax
import jax.numpy as jnp
import numpy as np
from jax.experimental import pallas as pl
from jax.experimental.pallas import tpu as pltpu


# ----------------------------------------------------------------------------
# Pallas kernel: fused conv KxK (stride 1, 'same' pad) + folded BN + ReLU
# ----------------------------------------------------------------------------
def conv_bn_relu_kernel(x_ref, w_ref, b_ref, o_ref, *, H, W, K):
    # x_ref: (N*Cin, H*W)            batch+channels on sublanes, spatial on lanes
    # w_ref: (N*Cout, K*K*N*Cin)     block-diagonal (per-batch) folded conv*BN
    #                                weights; column = t*(N*Cin) + n*Cin + ci
    # b_ref: (N*Cout, 1)             folded BN bias = beta - mean*scale (tiled per n)
    # o_ref: (N*Cout, H*W)
    HW = H * W
    pad = (K - 1) // 2

    x = x_ref[...].astype(jnp.float32)                      # (N*Cin, HW)

    # Flattened lane-position iota -> halo masks (built once, before tap loop).
    idx = jax.lax.broadcasted_iota(jnp.int32, (1, HW), 1)   # p = h*W + w
    if (W & (W - 1)) == 0:
        col = idx & (W - 1)                                  # p mod W, W power of 2
    else:
        col = idx % W   # TODO(synk): general-W fallback (untested vector int mod)

    def halo_mask(dh, dw):
        # Output position p is valid for tap (dh, dw) iff
        #   0 <= row+dh < H  and  0 <= col+dw < W.
        # The row bound is equivalent to 0 <= p + dh*W < HW (no division), and
        # the combined mask also zeroes exactly the lane-roll wrap-around.
        m = None
        if dh > 0:
            m = idx < (H - dh) * W
        elif dh < 0:
            m = idx >= (-dh) * W
        if dw > 0:
            cm = col < (W - dw)
            m = cm if m is None else (m & cm)
        elif dw < 0:
            cm = col >= (-dw)
            m = cm if m is None else (m & cm)
        return m

    masks = {(kh, kw): halo_mask(kh - pad, kw - pad)
             for kh in range(K) for kw in range(K)}

    # K*K rolls (one per tap, hoisted out of the channel loop) build the
    # im2col patch directly in registers.
    blocks = []
    for kh in range(K):
        dh = kh - pad
        for kw in range(K):
            dw = kw - pad
            shift = dh * W + dw                 # want xs[:, p] = x[:, p + shift]
            if shift != 0:
                xs = pltpu.roll(x, shift=(-shift) % HW, axis=1)
            else:
                xs = x
            m = masks[(kh, kw)]
            if m is not None:
                xs = jnp.where(m, xs, 0.0)      # one combined halo/wrap mask
            blocks.append(xs)
    patch = jnp.concatenate(blocks, axis=0)     # (K*K*N*Cin, HW)

    # Folded conv + BN scale as one MXU matmul; bias + ReLU on the VPU.
    y = jnp.dot(w_ref[...], patch,
                preferred_element_type=jnp.float32,
                precision=jax.lax.Precision.HIGHEST)         # (N*Cout, HW)
    y = y + b_ref[...]
    y = jnp.maximum(y, 0.0)                                  # ReLU ('RE')
    o_ref[...] = y.astype(o_ref.dtype)


# ----------------------------------------------------------------------------
# Wrapper: PyTorch-style NCHW in / NCHW out, BN folded on the host
# ----------------------------------------------------------------------------
def conv2d_bn_act(x_nchw, weight_oihw, gamma, beta, running_mean, running_var,
                  eps=0.01):
    """Forward of Conv2dBNActivation (eval-mode BN, ReLU) as a Pallas TPU kernel."""
    N, Cin, H, W = x_nchw.shape
    Cout, Cin_w, K, K2 = weight_oihw.shape
    assert Cin == Cin_w and K == K2
    assert K % 2 == 1, "even kernel sizes not supported (pad=(K-1)//2 assumes odd K)"
    HW = H * W

    # Fold BN (eval mode) into the conv weights / per-channel bias (host side,
    # tiny tensors, one-time cost).
    scale = (gamma.astype(jnp.float32)
             / jnp.sqrt(running_var.astype(jnp.float32) + eps))              # (Cout,)
    bias = beta.astype(jnp.float32) - running_mean.astype(jnp.float32) * scale

    w_folded = weight_oihw.astype(jnp.float32) * scale[:, None, None, None]  # (Cout,Cin,K,K)
    # (Cout, K*K, Cin) with tap index t = kh*K + kw.
    w_t = jnp.transpose(w_folded, (0, 2, 3, 1)).reshape(Cout, K * K, Cin)
    # Block-diagonal over the packed batch (kron with I_N) so one matmul covers
    # every batch element:  W_full[n*Cout+co, t*N*Cin + n*Cin + ci] = w_t[co,t,ci].
    w_full = jnp.einsum("nm,otc->notmc", jnp.eye(N, dtype=jnp.float32),
                        w_t).reshape(N * Cout, K * K * N * Cin)
    b_full = jnp.broadcast_to(bias, (N, Cout)).reshape(N * Cout, 1)

    # Free, contiguous reshape: batch+channels on sublanes, spatial on lanes.
    x_packed = x_nchw.reshape(N * Cin, HW)

    kernel = functools.partial(conv_bn_relu_kernel, H=H, W=W, K=K)

    itemsize = x_nchw.dtype.itemsize
    flops = 2 * N * H * W * K * K * Cin * Cout
    bytes_accessed = int((x_packed.size + N * Cout * HW) * itemsize
                         + (w_full.size + b_full.size) * 4)

    out_packed = pl.pallas_call(
        kernel,
        out_shape=jax.ShapeDtypeStruct((N * Cout, HW), x_nchw.dtype),
        grid_spec=pltpu.PrefetchScalarGridSpec(
            num_scalar_prefetch=0,
            grid=(1,),   # whole problem (~100 KiB) is VMEM-resident in one step
            in_specs=[
                pl.BlockSpec((N * Cin, HW), lambda b: (0, 0)),
                pl.BlockSpec((N * Cout, K * K * N * Cin), lambda b: (0, 0)),
                pl.BlockSpec((N * Cout, 1), lambda b: (0, 0)),
            ],
            out_specs=pl.BlockSpec((N * Cout, HW), lambda b: (0, 0)),
        ),
        compiler_params=pltpu.CompilerParams(
            dimension_semantics=("arbitrary",)),
        cost_estimate=pl.CostEstimate(flops=flops, transcendentals=0,
                                      bytes_accessed=bytes_accessed),
    )(x_packed, w_full, b_full)

    return out_packed.reshape(N, Cout, H, W)    # free reshape back to NCHW


# ----------------------------------------------------------------------------
# Pure-JAX reference (for correctness check)
# ----------------------------------------------------------------------------
def reference(x_nchw, weight_oihw, gamma, beta, running_mean, running_var,
              eps=0.01):
    K = weight_oihw.shape[-1]
    pad = (K - 1) // 2
    y = jax.lax.conv_general_dilated(
        x_nchw, weight_oihw, window_strides=(1, 1),
        padding=((pad, pad), (pad, pad)),
        dimension_numbers=("NCHW", "OIHW", "NCHW"),
        precision=jax.lax.Precision.HIGHEST)
    scale = (gamma / jnp.sqrt(running_var + eps)).reshape(1, -1, 1, 1)
    bias = (beta - running_mean * gamma / jnp.sqrt(running_var + eps)
            ).reshape(1, -1, 1, 1)
    return jnp.maximum(y * scale + bias, 0.0)


if __name__ == "__main__":
    # Small deterministic config matching the module defaults: in_channels=4,
    # out_channels=8, kernel_size=3, stride=1, groups=1, dilation=1,
    # activation='RE' (ReLU), eval-mode BatchNorm (eps=0.01).
    N, Cin, H, W = 2, 4, 16, 16
    Cout, K = 8, 3

    key = jax.random.PRNGKey(0)
    kx, kw = jax.random.split(key)
    x = jax.random.normal(kx, (N, Cin, H, W), dtype=jnp.float32)

    # Deterministic parameter init (no checkpoint): kaiming-like conv weight,
    # non-trivial BN params so the folded scale/bias path is exercised.
    fan_in = Cin * K * K
    weight = jax.random.normal(kw, (Cout, Cin, K, K), dtype=jnp.float32) * (
        (2.0 / fan_in) ** 0.5)
    gamma = jnp.linspace(0.5, 1.5, Cout, dtype=jnp.float32)
    beta = jnp.linspace(-0.1, 0.1, Cout, dtype=jnp.float32)
    running_mean = jnp.linspace(-0.2, 0.2, Cout, dtype=jnp.float32)
    running_var = jnp.linspace(0.5, 1.0, Cout, dtype=jnp.float32)

    out = conv2d_bn_act(x, weight, gamma, beta, running_mean, running_var)
    out = jax.block_until_ready(out)

    ref = reference(x, weight, gamma, beta, running_mean, running_var)
    np.testing.assert_allclose(np.asarray(out), np.asarray(ref),
                               rtol=1e-3, atol=1e-3)
    print("KERNEL_OK")
</pallas_src>

<mosaic_0001>
module attributes {stable_mosaic.version = 11 : i64} {
  func.func @conv_bn_relu_kernel(%arg0: i32, %arg1: memref<8x256xf32, #tpu.memory_space<vmem>>, %arg2: memref<16x72xf32, #tpu.memory_space<vmem>>, %arg3: memref<16x1xf32, #tpu.memory_space<vmem>>, %arg4: memref<16x256xf32, #tpu.memory_space<vmem>>) attributes {dimension_semantics = [#tpu.dimension_semantics<arbitrary>], iteration_bounds = array<i64: 1>, scalar_prefetch = 0 : i64, scratch_operands = 0 : i64, tpu.core_type = #tpu.core_type<tc>, window_params = [{pipeline_mode = #tpu.pipeline_mode<synchronous>, transform_indices = @transform_0, window_bounds = array<i64: 8, 256>}, {pipeline_mode = #tpu.pipeline_mode<synchronous>, transform_indices = @transform_1, window_bounds = array<i64: 16, 72>}, {pipeline_mode = #tpu.pipeline_mode<synchronous>, transform_indices = @transform_2, window_bounds = array<i64: 16, 1>}, {pipeline_mode = #tpu.pipeline_mode<synchronous>, transform_indices = @transform_3, window_bounds = array<i64: 16, 256>}]} {
    %c0 = arith.constant 0 : index
    %c0_0 = arith.constant 0 : index
    %0 = vector.load %arg1[%c0, %c0_0] : memref<8x256xf32, #tpu.memory_space<vmem>>, vector<8x256xf32>
    %1 = tpu.iota {dimensions = array<i32: 1>} : vector<1x256xi32>
    %c15_i32 = arith.constant 15 : i32
    %2 = vector.broadcast %c15_i32 : i32 to vector<1x256xi32>
    %3 = arith.andi %1, %2 : vector<1x256xi32>
    %c16_i32 = arith.constant 16 : i32
    %4 = vector.broadcast %c16_i32 : i32 to vector<1x256xi32>
    %5 = arith.cmpi sge, %1, %4 : vector<1x256xi32>
    %c1_i32 = arith.constant 1 : i32
    %6 = vector.broadcast %c1_i32 : i32 to vector<1x256xi32>
    %7 = arith.cmpi sge, %3, %6 : vector<1x256xi32>
    %8 = arith.andi %5, %7 : vector<1x256xi1>
    %c16_i32_1 = arith.constant 16 : i32
    %9 = vector.broadcast %c16_i32_1 : i32 to vector<1x256xi32>
    %10 = arith.cmpi sge, %1, %9 : vector<1x256xi32>
    %c16_i32_2 = arith.constant 16 : i32
    %11 = vector.broadcast %c16_i32_2 : i32 to vector<1x256xi32>
    %12 = arith.cmpi sge, %1, %11 : vector<1x256xi32>
    %c15_i32_3 = arith.constant 15 : i32
    %13 = vector.broadcast %c15_i32_3 : i32 to vector<1x256xi32>
    %14 = arith.cmpi slt, %3, %13 : vector<1x256xi32>
    %15 = arith.andi %12, %14 : vector<1x256xi1>
    %c1_i32_4 = arith.constant 1 : i32
    %16 = vector.broadcast %c1_i32_4 : i32 to vector<1x256xi32>
    %17 = arith.cmpi sge, %3, %16 : vector<1x256xi32>
    %c15_i32_5 = arith.constant 15 : i32
    %18 = vector.broadcast %c15_i32_5 : i32 to vector<1x256xi32>
    %19 = arith.cmpi slt, %3, %18 : vector<1x256xi32>
    %c240_i32 = arith.constant 240 : i32
    %20 = vector.broadcast %c240_i32 : i32 to vector<1x256xi32>
    %21 = arith.cmpi slt, %1, %20 : vector<1x256xi32>
    %c1_i32_6 = arith.constant 1 : i32
    %22 = vector.broadcast %c1_i32_6 : i32 to vector<1x256xi32>
    %23 = arith.cmpi sge, %3, %22 : vector<1x256xi32>
    %24 = arith.andi %21, %23 : vector<1x256xi1>
    %c240_i32_7 = arith.constant 240 : i32
    %25 = vector.broadcast %c240_i32_7 : i32 to vector<1x256xi32>
    %26 = arith.cmpi slt, %1, %25 : vector<1x256xi32>
    %c240_i32_8 = arith.constant 240 : i32
    %27 = vector.broadcast %c240_i32_8 : i32 to vector<1x256xi32>
    %28 = arith.cmpi slt, %1, %27 : vector<1x256xi32>
    %c15_i32_9 = arith.constant 15 : i32
    %29 = vector.broadcast %c15_i32_9 : i32 to vector<1x256xi32>
    %30 = arith.cmpi slt, %3, %29 : vector<1x256xi32>
    %31 = arith.andi %28, %30 : vector<1x256xi1>
    %c17_i32 = arith.constant 17 : i32
    %32 = tpu.dynamic_rotate %0 by %c17_i32 dim 1 : vector<8x256xf32>, i32 -> vector<8x256xf32>
    %cst = arith.constant 0.000000e+00 : f32
    %33 = vector.shape_cast %8 : vector<1x256xi1> to vector<1x256xi1>
    %34 = vector.broadcast %33 : vector<1x256xi1> to vector<8x256xi1>
    %35 = vector.broadcast %cst : f32 to vector<8x256xf32>
    %36 = arith.select %34, %32, %35 : vector<8x256xi1>, vector<8x256xf32>
    %c16_i32_10 = arith.constant 16 : i32
    %37 = tpu.dynamic_rotate %0 by %c16_i32_10 dim 1 : vector<8x256xf32>, i32 -> vector<8x256xf32>
    %cst_11 = arith.constant 0.000000e+00 : f32
    %38 = vector.shape_cast %10 : vector<1x256xi1> to vector<1x256xi1>
    %39 = vector.broadcast %38 : vector<1x256xi1> to vector<8x256xi1>
    %40 = vector.broadcast %cst_11 : f32 to vector<8x256xf32>
    %41 = arith.select %39, %37, %40 : vector<8x256xi1>, vector<8x256xf32>
    %c15_i32_12 = arith.constant 15 : i32
    %42 = tpu.dynamic_rotate %0 by %c15_i32_12 dim 1 : vector<8x256xf32>, i32 -> vector<8x256xf32>
    %cst_13 = arith.constant 0.000000e+00 : f32
    %43 = vector.shape_cast %15 : vector<1x256xi1> to vector<1x256xi1>
    %44 = vector.broadcast %43 : vector<1x256xi1> to vector<8x256xi1>
    %45 = vector.broadcast %cst_13 : f32 to vector<8x256xf32>
    %46 = arith.select %44, %42, %45 : vector<8x256xi1>, vector<8x256xf32>
    %c1_i32_14 = arith.constant 1 : i32
    %47 = tpu.dynamic_rotate %0 by %c1_i32_14 dim 1 : vector<8x256xf32>, i32 -> vector<8x256xf32>
    %cst_15 = arith.constant 0.000000e+00 : f32
    %48 = vector.shape_cast %17 : vector<1x256xi1> to vector<1x256xi1>
    %49 = vector.broadcast %48 : vector<1x256xi1> to vector<8x256xi1>
    %50 = vector.broadcast %cst_15 : f32 to vector<8x256xf32>
    %51 = arith.select %49, %47, %50 : vector<8x256xi1>, vector<8x256xf32>
    %c255_i32 = arith.constant 255 : i32
    %52 = tpu.dynamic_rotate %0 by %c255_i32 dim 1 : vector<8x256xf32>, i32 -> vector<8x256xf32>
    %cst_16 = arith.constant 0.000000e+00 : f32
    %53 = vector.shape_cast %19 : vector<1x256xi1> to vector<1x256xi1>
    %54 = vector.broadcast %53 : vector<1x256xi1> to vector<8x256xi1>
    %55 = vector.broadcast %cst_16 : f32 to vector<8x256xf32>
    %56 = arith.select %54, %52, %55 : vector<8x256xi1>, vector<8x256xf32>
    %c241_i32 = arith.constant 241 : i32
    %57 = tpu.dynamic_rotate %0 by %c241_i32 dim 1 : vector<8x256xf32>, i32 -> vector<8x256xf32>
    %cst_17 = arith.constant 0.000000e+00 : f32
    %58 = vector.shape_cast %24 : vector<1x256xi1> to vector<1x256xi1>
    %59 = vector.broadcast %58 : vector<1x256xi1> to vector<8x256xi1>
    %60 = vector.broadcast %cst_17 : f32 to vector<8x256xf32>
    %61 = arith.select %59, %57, %60 : vector<8x256xi1>, vector<8x256xf32>
    %c240_i32_18 = arith.constant 240 : i32
    %62 = tpu.dynamic_rotate %0 by %c240_i32_18 dim 1 : vector<8x256xf32>, i32 -> vector<8x256xf32>
    %cst_19 = arith.constant 0.000000e+00 : f32
    %63 = vector.shape_cast %26 : vector<1x256xi1> to vector<1x256xi1>
    %64 = vector.broadcast %63 : vector<1x256xi1> to vector<8x256xi1>
    %65 = vector.broadcast %cst_19 : f32 to vector<8x256xf32>
    %66 = arith.select %64, %62, %65 : vector<8x256xi1>, vector<8x256xf32>
    %c239_i32 = arith.constant 239 : i32
    %67 = tpu.dynamic_rotate %0 by %c239_i32 dim 1 : vector<8x256xf32>, i32 -> vector<8x256xf32>
    %cst_20 = arith.constant 0.000000e+00 : f32
    %68 = vector.shape_cast %31 : vector<1x256xi1> to vector<1x256xi1>
    %69 = vector.broadcast %68 : vector<1x256xi1> to vector<8x256xi1>
    %70 = vector.broadcast %cst_20 : f32 to vector<8x256xf32>
    %71 = arith.select %69, %67, %70 : vector<8x256xi1>, vector<8x256xf32>
    %72 = tpu.concatenate %36, %41, %46, %51, %0, %56, %61, %66, %71 in 0 : vector<8x256xf32>, vector<8x256xf32>, vector<8x256xf32>, vector<8x256xf32>, vector<8x256xf32>, vector<8x256xf32>, vector<8x256xf32>, vector<8x256xf32>, vector<8x256xf32> -> vector<72x256xf32>
    %c0_21 = arith.constant 0 : index
    %c0_22 = arith.constant 0 : index
    %73 = vector.load %arg2[%c0_21, %c0_22] : memref<16x72xf32, #tpu.memory_space<vmem>>, vector<16x72xf32>
    %cst_23 = arith.constant dense<0.000000e+00> : vector<16x256xf32>
    %74 = tpu.matmul %73, %72, %cst_23 {dimension_numbers = #tpu.dot_dimension_numbers<[1], [0], [0], [1], [0, 0, 1, 1], [], []>, precision = #tpu.contract_precision<fp32>} : vector<16x72xf32>, vector<72x256xf32>, vector<16x256xf32> -> vector<16x256xf32>
    %c0_24 = arith.constant 0 : index
    %c0_25 = arith.constant 0 : index
    %75 = vector.load %arg3[%c0_24, %c0_25] : memref<16x1xf32, #tpu.memory_space<vmem>>, vector<16x1xf32>
    %76 = vector.broadcast %75 : vector<16x1xf32> to vector<16x256xf32>
    %77 = arith.addf %74, %76 : vector<16x256xf32>
    %cst_26 = arith.constant 0.000000e+00 : f32
    %78 = vector.broadcast %cst_26 : f32 to vector<16x256xf32>
    %79 = arith.maximumf %77, %78 : vector<16x256xf32>
    %c0_27 = arith.constant 0 : index
    %c0_28 = arith.constant 0 : index
    %80 = vector.load %arg4[%c0_27, %c0_28] : memref<16x256xf32, #tpu.memory_space<vmem>>, vector<16x256xf32>
    tpu.vector_store %arg4[%c0_27, %c0_28], %79 {strides = array<i32>} : memref<16x256xf32, #tpu.memory_space<vmem>>, vector<16x256xf32>,
    return
  }
  func.func @transform_0(%arg0: i32) -> (i32, i32) {
    %c0_i32 = arith.constant 0 : i32
    %c0_i32_0 = arith.constant 0 : i32
    %c0_i32_1 = arith.constant 0 : i32
    return %c0_i32, %c0_i32_0 : i32, i32
  }
  func.func @transform_1(%arg0: i32) -> (i32, i32) {
    %c0_i32 = arith.constant 0 : i32
    %c0_i32_0 = arith.constant 0 : i32
    %c0_i32_1 = arith.constant 0 : i32
    return %c0_i32, %c0_i32_0 : i32, i32
  }
  func.func @transform_2(%arg0: i32) -> (i32, i32) {
    %c0_i32 = arith.constant 0 : i32
    %c0_i32_0 = arith.constant 0 : i32
    %c0_i32_1 = arith.constant 0 : i32
    return %c0_i32, %c0_i32_0 : i32, i32
  }
  func.func @transform_3(%arg0: i32) -> (i32, i32) {
    %c0_i32 = arith.constant 0 : i32
    %c0_i32_0 = arith.constant 0 : i32
    %c0_i32_1 = arith.constant 0 : i32
    return %c0_i32, %c0_i32_0 : i32, i32
  }
}

</mosaic_0001>

<llo_original>
// kernel: tpu_custom_call.1
$region0: #{tpu_custom_call.1}
  #allocation0 [shape = 'u32[]', space=smem, size = 0x4, offset = 0x4, fixed_abs, tag = 'smem constant byte address 0x4 - core index']
  #allocation1 [shape = 'u32[144,128]{1,0:T(1,128)}', space=vmem, size = 0x12000, scoped, tag = 'internal scratch']
  %s0 = inlined_call_operand.vmem [shape: f32[8,256], index: 0, kind: input, shape index: {}]
  %s1 = inlined_call_operand.hbm [shape: f32[16,72], index: 1, kind: input, shape index: {}]
  %s2 = inlined_call_operand.vmem [shape: f32[16,1], index: 2, kind: input, shape index: {}]
  %s3 = inlined_call_operand.hbm [shape: f32[16,256], index: 3, kind: output, shape index: {}]
  %s4 = sld [smem:[#allocation0]]
  $region26: #{tpu_custom_call.1} parent=0
    _
  %s6 = ssub.s32 1, %s4
  %s7 = scalar_select 0, %s6, %s4
  $region1: #{tpu_custom_call.1} parent=0
    #allocation2 [shape = 'u8[8192]{0}', space=vmem, size = 0x2000, scoped, tag = 'input window, operand 1, single buffered']
    #allocation3 [shape = 's32[1]{0}', space=sflag, size = 0x4, scoped, tag = 'scoped memory for tpu_custom_call.1']
    #allocation4 [shape = 's32[1]{0}', space=sflag, size = 0x4, scoped, tag = 'scoped memory for tpu_custom_call.1']
    #allocation5 [shape = 'u8[16384]{0}', space=vmem, size = 0x4000, scoped, tag = 'output window, operand 0, single buffered']
    %8 = vsyncpa [#allocation3], 0
    %9 = vsyncpa [#allocation4], 0
    // Predicated region
    $region2: #{tpu_custom_call.1} parent=1 // pred_check
      _
    $region3: #{tpu_custom_call.1} parent=1 // pred_check_branch
      %11 = sbr.rel (0) target = $region5
    $region4: #{tpu_custom_call.1} parent=1 // pred_region
      _
    $region5: #{tpu_custom_call.1} parent=1 // pred_fallthru
      _
    // Predicated region
    $region6: #{tpu_custom_call.1} parent=1 // pred_check
      _
    $region7: #{tpu_custom_call.1} parent=1 // pred_check_branch
      %13 = sbr.rel (0) target = $region9
    $region8: #{tpu_custom_call.1} parent=1 // pred_region
      %s15 = ssub.s32 256, 256
      %16 = vsyncadd [#allocation3], %s15
      %s17 = sshll.u32 [#allocation2], 4
      %s18 = int_to_ptr.vmem [resolvable:$true] %s17
      %23 = dma.hbm_to_vmem [thread:$0]  %s1, 256, %s18, [#allocation3], 128, 128, 8
    $region9: #{tpu_custom_call.1} parent=1 // pred_fallthru
      _
    // Predicated region
    $region10: #{tpu_custom_call.1} parent=1 // pred_check
      _
    $region11: #{tpu_custom_call.1} parent=1 // pred_check_branch
      %25 = sbr.rel (0) target = $region13
    $region12: #{tpu_custom_call.1} parent=1 // pred_region
      _
    $region13: #{tpu_custom_call.1} parent=1 // pred_fallthru
      _
    // Predicated region
    $region14: #{tpu_custom_call.1} parent=1 // pred_check
      _
    $region15: #{tpu_custom_call.1} parent=1 // pred_check_branch
      %27 = sbr.rel (0) target = $region17
    $region16: #{tpu_custom_call.1} parent=1 // pred_region
      %28 = dma.done [#allocation3], 256
    $region17: #{tpu_custom_call.1} parent=1 // pred_fallthru
      _
    %v29 = vld [vmem:[%s0] sm:$0xff]
    %v30 = vld [vmem:[%s0 + $0x8] sm:$0xff]
    %v31 = vlaneseq
    %v32 = vand.u32 %v31, 127
    %v33 = vadd.s32 %v32, 128
    %v34 = vand.u32 %v32, 15
    %v35 = vand.u32 %v33, 15
    %vm36 = vcmp.ge.s32.totalorder %v32, 16
    %vm37 = vcmp.ge.s32.totalorder %v33, 16
    %vm38 = vcmp.ge.s32.totalorder %v34, 1
    %vm39 = vcmp.ge.s32.totalorder %v35, 1
    %vm40 = vmand %vm36, %vm38
    %vm41 = vmand %vm37, %vm39
    %vm42 = vcmp.lt.s32.totalorder %v34, 15
    %vm43 = vcmp.lt.s32.totalorder %v35, 15
    %vm44 = vmand %vm36, %vm42
    %vm45 = vmand %vm37, %vm43
    %vm46 = vcmp.lt.s32.totalorder %v32, 240
    %vm47 = vcmp.lt.s32.totalorder %v33, 240
    %vm48 = vmand %vm46, %vm38
    %vm49 = vmand %vm47, %vm39
    %vm50 = vmand %vm46, %vm42
    %vm51 = vmand %vm47, %vm43
    %52 = vrot.lane.b32.xlu0 %v29, 17
    %v53 = vpop.permute.xlu0 %52
    %54 = vrot.lane.b32.xlu0 %v30, 17
    %v55 = vpop.permute.xlu0 %54
    %vm56 = vcmp.lt.s32.totalorder %v32, 17
    %v57 = vsel %vm56, %v53, %v55
    %v58 = vsel %vm56, %v55, %v53
    %v59 = vsel %vm40, 1, 0
    %v60 = vsel %vm41, 1, 0
    %vm61 = vcmp.eq.s32.totalorder %v59, 1
    %vm62 = vcmp.eq.s32.totalorder %v60, 1
    %v63 = vsel %vm61, %v58, 0.0
    %v64 = vsel %vm62, %v57, 0.0
    %65 = vrot.lane.b32.xlu0 %v29, 16
    %v66 = vpop.permute.xlu0 %65
    %67 = vrot.lane.b32.xlu0 %v30, 16
    %v68 = vpop.permute.xlu0 %67
    %vm69 = vcmp.lt.s32.totalorder %v32, 16
    %v70 = vsel %vm69, %v66, %v68
    %v71 = vsel %vm69, %v68, %v66
    %v72 = vsel %vm36, 1, 0
    %v73 = vsel %vm37, 1, 0
    %vm74 = vcmp.eq.s32.totalorder %v72, 1
    %vm75 = vcmp.eq.s32.totalorder %v73, 1
    %v76 = vsel %vm74, %v71, 0.0
    %v77 = vsel %vm75, %v70, 0.0
    %78 = vrot.lane.b32.xlu0 %v29, 15
    %v79 = vpop.permute.xlu0 %78
    %80 = vrot.lane.b32.xlu0 %v30, 15
    %v81 = vpop.permute.xlu0 %80
    %vm82 = vcmp.lt.s32.totalorder %v32, 15
    %v83 = vsel %vm82, %v79, %v81
    %v84 = vsel %vm82, %v81, %v79
    %v85 = vsel %vm44, 1, 0
    %v86 = vsel %vm45, 1, 0
    %vm87 = vcmp.eq.s32.totalorder %v85, 1
    %vm88 = vcmp.eq.s32.totalorder %v86, 1
    %v89 = vsel %vm87, %v84, 0.0
    %v90 = vsel %vm88, %v83, 0.0
    %91 = vrot.lane.b32.xlu0 %v29, 1
    %v92 = vpop.permute.xlu0 %91
    %93 = vrot.lane.b32.xlu0 %v30, 1
    %v94 = vpop.permute.xlu0 %93
    %vm95 = vcmp.lt.s32.totalorder %v32, 1
    %v96 = vsel %vm95, %v92, %v94
    %v97 = vsel %vm95, %v94, %v92
    %v98 = vsel %vm38, 1, 0
    %v99 = vsel %vm39, 1, 0
    %vm100 = vcmp.eq.s32.totalorder %v98, 1
    %vm101 = vcmp.eq.s32.totalorder %v99, 1
    %v102 = vsel %vm100, %v97, 0.0
    %v103 = vsel %vm101, %v96, 0.0
    %104 = vrot.lane.b32.xlu0 %v29, 127
    %v105 = vpop.permute.xlu0 %104
    %106 = vrot.lane.b32.xlu0 %v30, 127
    %v107 = vpop.permute.xlu0 %106
    %vm108 = vcmp.lt.s32.totalorder %v32, 127
    %v109 = vsel %vm108, %v105, %v107
    %v110 = vsel %vm108, %v107, %v105
    %v111 = vsel %vm42, 1, 0
    %v112 = vsel %vm43, 1, 0
    %vm113 = vcmp.eq.s32.totalorder %v111, 1
    %vm114 = vcmp.eq.s32.totalorder %v112, 1
    %v115 = vsel %vm113, %v109, 0.0
    %v116 = vsel %vm114, %v110, 0.0
    %117 = vrot.lane.b32.xlu0 %v29, 113
    %v118 = vpop.permute.xlu0 %117
    %119 = vrot.lane.b32.xlu0 %v30, 113
    %v120 = vpop.permute.xlu0 %119
    %vm121 = vcmp.lt.s32.totalorder %v32, 113
    %v122 = vsel %vm121, %v118, %v120
    %v123 = vsel %vm121, %v120, %v118
    %v124 = vsel %vm48, 1, 0
    %v125 = vsel %vm49, 1, 0
    %vm126 = vcmp.eq.s32.totalorder %v124, 1
    %vm127 = vcmp.eq.s32.totalorder %v125, 1
    %v128 = vsel %vm126, %v122, 0.0
    %v129 = vsel %vm127, %v123, 0.0
    %130 = vrot.lane.b32.xlu0 %v29, 112
    %v131 = vpop.permute.xlu0 %130
    %132 = vrot.lane.b32.xlu0 %v30, 112
    %v133 = vpop.permute.xlu0 %132
    %vm134 = vcmp.lt.s32.totalorder %v32, 112
    %v135 = vsel %vm134, %v131, %v133
    %v136 = vsel %vm134, %v133, %v131
    %v137 = vsel %vm46, 1, 0
    %v138 = vsel %vm47, 1, 0
    %vm139 = vcmp.eq.s32.totalorder %v137, 1
    %vm140 = vcmp.eq.s32.totalorder %v138, 1
    %v141 = vsel %vm139, %v135, 0.0
    %v142 = vsel %vm140, %v136, 0.0
    %143 = vrot.lane.b32.xlu0 %v29, 111
    %v144 = vpop.permute.xlu0 %143
    %145 = vrot.lane.b32.xlu0 %v30, 111
    %v146 = vpop.permute.xlu0 %145
    %vm147 = vcmp.lt.s32.totalorder %v32, 111
    %v148 = vsel %vm147, %v144, %v146
    %v149 = vsel %vm147, %v146, %v144
    %v150 = vsel %vm50, 1, 0
    %v151 = vsel %vm51, 1, 0
    %vm152 = vcmp.eq.s32.totalorder %v150, 1
    %vm153 = vcmp.eq.s32.totalorder %v151, 1
    %v154 = vsel %vm152, %v148, 0.0
    %v155 = vsel %vm153, %v149, 0.0
    %v156 = vld [vmem:[#allocation2] sm:$0xff]
    %v157 = vld [vmem:[#allocation2 + $0x8] sm:$0xff]
    %v158 = vld [vmem:[%s2] sm:$0xff]
    %v159 = vld [vmem:[%s2 + $0x8] sm:$0xff]
    %161 = vset.pattern.permute.xlu0 0
    %162 = vperm.xlu0 %161, %v158
    %v163 = vpop.permute.xlu0 %162
    %166 = vset.pattern.permute.xlu0 0
    %167 = vperm.xlu0 %166, %v159
    %v168 = vpop.permute.xlu0 %167
    %vm170 = vcmask 588800
    %v172 = vsel %vm170, %v156, 0
    %v175 = vsel %vm170, %v157, 0
    %177 = vmatprep.subr.mxu0 0.0
    %178 = vmatpush1.msra.mxu0 0.0
    %179 = vmatprep.subr.mxu0 0.0
    %180 = vmatpush1.msra.mxu0 0.0
    %181 = vmatprep.subr.mxu0 0.0
    %182 = vmatpush1.msra.mxu0 0.0
    %183 = vmatprep.subr.mxu0 0.0
    %184 = vmatpush1.msra.mxu0 0.0
    %185 = vmatprep.subr.mxu0 0.0
    %186 = vmatpush1.msra.mxu0 0.0
    %187 = vmatprep.subr.mxu0 0.0
    %188 = vmatpush1.msra.mxu0 0.0
    %189 = vmatprep.subr.mxu0 0.0
    %190 = vmatpush1.msra.mxu0 0.0
    %v191 = vand.u32 %v155, 4294901760
    %192 = vmatprep.subr.mxu0 %v191
    %v193 = vand.u32 %v154, 4294901760
    %194 = vmatpush1.msra.mxu0 %v193
    %v195 = vand.u32 %v142, 4294901760
    %196 = vmatprep.subr.mxu0 %v195
    %v197 = vand.u32 %v141, 4294901760
    %198 = vmatpush1.msra.mxu0 %v197
    %v199 = vand.u32 %v129, 4294901760
    %200 = vmatprep.subr.mxu0 %v199
    %v201 = vand.u32 %v128, 4294901760
    %202 = vmatpush1.msra.mxu0 %v201
    %v203 = vand.u32 %v116, 4294901760
    %204 = vmatprep.subr.mxu0 %v203
    %v205 = vand.u32 %v115, 4294901760
    %206 = vmatpush1.msra.mxu0 %v205
    %v207 = vand.u32 %v30, 4294901760
    %208 = vmatprep.subr.mxu0 %v207
    %v209 = vand.u32 %v29, 4294901760
    %210 = vmatpush1.msra.mxu0 %v209
    %v211 = vand.u32 %v103, 4294901760
    %212 = vmatprep.subr.mxu0 %v211
    %v213 = vand.u32 %v102, 4294901760
    %214 = vmatpush1.msra.mxu0 %v213
    %v215 = vand.u32 %v90, 4294901760
    %216 = vmatprep.subr.mxu0 %v215
    %v217 = vand.u32 %v89, 4294901760
    %218 = vmatpush1.msra.mxu0 %v217
    %v219 = vand.u32 %v77, 4294901760
    %220 = vmatprep.subr.mxu0 %v219
    %v221 = vand.u32 %v76, 4294901760
    %222 = vmatpush1.msra.mxu0 %v221
    %v223 = vand.u32 %v64, 4294901760
    %224 = vmatprep.subr.mxu0 %v223
    %v225 = vand.u32 %v63, 4294901760
    %226 = vmatpush1.msra.mxu0 %v225
    %227 = vmatprep.subr.mxu0 0.0
    %228 = vmatpush2.msra.mxu0 0.0
    %229 = vmatprep.subr.mxu0 0.0
    %230 = vmatpush2.msra.mxu0 0.0
    %231 = vmatprep.subr.mxu0 0.0
    %232 = vmatpush2.msra.mxu0 0.0
    %233 = vmatprep.subr.mxu0 0.0
    %234 = vmatpush2.msra.mxu0 0.0
    %235 = vmatprep.subr.mxu0 0.0
    %236 = vmatpush2.msra.mxu0 0.0
    %237 = vmatprep.subr.mxu0 0.0
    %238 = vmatpush2.msra.mxu0 0.0
    %239 = vmatprep.subr.mxu0 0.0
    %240 = vmatpush2.msra.mxu0 0.0
    %241 = vmatprep.subr.mxu0 0.0
    %242 = vmatpush2.msra.mxu0 0.0
    %243 = vmatprep.subr.mxu0 0.0
    %244 = vmatpush2.msra.mxu0 0.0
    %245 = vmatprep.subr.mxu0 0.0
    %246 = vmatpush2.msra.mxu0 0.0
    %247 = vmatprep.subr.mxu0 0.0
    %248 = vmatpush2.msra.mxu0 0.0
    %249 = vmatprep.subr.mxu0 0.0
    %250 = vmatpush2.msra.mxu0 0.0
    %251 = vmatprep.subr.mxu0 0.0
    %252 = vmatpush2.msra.mxu0 0.0
    %253 = vmatprep.subr.mxu0 0.0
    %254 = vmatpush2.msra.mxu0 0.0
    %255 = vmatprep.subr.mxu0 0.0
    %256 = vmatpush2.msra.mxu0 0.0
    %257 = vmatprep.subr.mxu0 0.0
    %258 = vmatpush2.msra.mxu0 0.0
    %259 = vmatprep.mubr.f32.mxu0 0.0
    %v260 = vand.u32 %v172, 4294901760
    %v261 = vsub.f32 %v172, %v260
    %v262 = vand.u32 %v261, 4294901760
    %v263 = vsub.f32 %v261, %v262
    %v264 = vand.u32 %v263, 4294901760
    %265 = vmatmul.mubr.f32.gmra.mxu0 %v264
    %v266 = vpop.f32.mrf.mxu0
    %v267 = vadd.f32 %v163, %v266
    %v268 = vpop.f32.mrf.mxu0
    %v269 = vadd.f32 %v163, %v268
    %270 = vmatprep.mubr.f32.mxu0 0.0
    %v271 = vand.u32 %v175, 4294901760
    %v272 = vsub.f32 %v175, %v271
    %v273 = vand.u32 %v272, 4294901760
    %v274 = vsub.f32 %v272, %v273
    %v275 = vand.u32 %v274, 4294901760
    %276 = vmatmul.mubr.f32.gmra.mxu0 %v275
    %v277 = vpop.f32.mrf.mxu0
    %v278 = vadd.f32 %v168, %v277
    %v279 = vpop.f32.mrf.mxu0
    %v280 = vadd.f32 %v168, %v279
    %281 = vdwg.mxu0
    %282 = vmatprep.subr.mxu0 0.0
    %283 = vmatpush1.msra.mxu0 0.0
    %284 = vmatprep.subr.mxu0 0.0
    %285 = vmatpush1.msra.mxu0 0.0
    %286 = vmatprep.subr.mxu0 0.0
    %287 = vmatpush1.msra.mxu0 0.0
    %288 = vmatprep.subr.mxu0 0.0
    %289 = vmatpush1.msra.mxu0 0.0
    %290 = vmatprep.subr.mxu0 0.0
    %291 = vmatpush1.msra.mxu0 0.0
    %292 = vmatprep.subr.mxu0 0.0
    %293 = vmatpush1.msra.mxu0 0.0
    %294 = vmatprep.subr.mxu0 0.0
    %295 = vmatpush1.msra.mxu0 0.0
    %v296 = vand.u32 %v155, 4294901760
    %v297 = vsub.f32 %v155, %v296
    %v298 = vand.u32 %v297, 4294901760
    %v299 = vsub.f32 %v297, %v298
    %v300 = vand.u32 %v299, 4294901760
    %301 = vmatprep.subr.mxu0 %v300
    %v302 = vand.u32 %v154, 4294901760
    %v303 = vsub.f32 %v154, %v302
    %v304 = vand.u32 %v303, 4294901760
    %v305 = vsub.f32 %v303, %v304
    %v306 = vand.u32 %v305, 4294901760
    %307 = vmatpush1.msra.mxu0 %v306
    %v308 = vand.u32 %v142, 4294901760
    %v309 = vsub.f32 %v142, %v308
    %v310 = vand.u32 %v309, 4294901760
    %v311 = vsub.f32 %v309, %v310
    %v312 = vand.u32 %v311, 4294901760
    %313 = vmatprep.subr.mxu0 %v312
    %v314 = vand.u32 %v141, 4294901760
    %v315 = vsub.f32 %v141, %v314
    %v316 = vand.u32 %v315, 4294901760
    %v317 = vsub.f32 %v315, %v316
    %v318 = vand.u32 %v317, 4294901760
    %319 = vmatpush1.msra.mxu0 %v318
    %v320 = vand.u32 %v129, 4294901760
    %v321 = vsub.f32 %v129, %v320
    %v322 = vand.u32 %v321, 4294901760
    %v323 = vsub.f32 %v321, %v322
    %v324 = vand.u32 %v323, 4294901760
    %325 = vmatprep.subr.mxu0 %v324
    %v326 = vand.u32 %v128, 4294901760
    %v327 = vsub.f32 %v128, %v326
    %v328 = vand.u32 %v327, 4294901760
    %v329 = vsub.f32 %v327, %v328
    %v330 = vand.u32 %v329, 4294901760
    %331 = vmatpush1.msra.mxu0 %v330
    %v332 = vand.u32 %v116, 4294901760
    %v333 = vsub.f32 %v116, %v332
    %v334 = vand.u32 %v333, 4294901760
    %v335 = vsub.f32 %v333, %v334
    %v336 = vand.u32 %v335, 4294901760
    %337 = vmatprep.subr.mxu0 %v336
    %v338 = vand.u32 %v115, 4294901760
    %v339 = vsub.f32 %v115, %v338
    %v340 = vand.u32 %v339, 4294901760
    %v341 = vsub.f32 %v339, %v340
    %v342 = vand.u32 %v341, 4294901760
    %343 = vmatpush1.msra.mxu0 %v342
    %v344 = vand.u32 %v30, 4294901760
    %v345 = vsub.f32 %v30, %v344
    %v346 = vand.u32 %v345, 4294901760
    %v347 = vsub.f32 %v345, %v346
    %v348 = vand.u32 %v347, 4294901760
    %349 = vmatprep.subr.mxu0 %v348
    %v350 = vand.u32 %v29, 4294901760
    %v351 = vsub.f32 %v29, %v350
    %v352 = vand.u32 %v351, 4294901760
    %v353 = vsub.f32 %v351, %v352
    %v354 = vand.u32 %v353, 4294901760
    %355 = vmatpush1.msra.mxu0 %v354
    %v356 = vand.u32 %v103, 4294901760
    %v357 = vsub.f32 %v103, %v356
    %v358 = vand.u32 %v357, 4294901760
    %v359 = vsub.f32 %v357, %v358
    %v360 = vand.u32 %v359, 4294901760
    %361 = vmatprep.subr.mxu0 %v360
    %v362 = vand.u32 %v102, 4294901760
    %v363 = vsub.f32 %v102, %v362
    %v364 = vand.u32 %v363, 4294901760
    %v365 = vsub.f32 %v363, %v364
    %v366 = vand.u32 %v365, 4294901760
    %367 = vmatpush1.msra.mxu0 %v366
    %v368 = vand.u32 %v90, 4294901760
    %v369 = vsub.f32 %v90, %v368
    %v370 = vand.u32 %v369, 4294901760
    %v371 = vsub.f32 %v369, %v370
    %v372 = vand.u32 %v371, 4294901760
    %373 = vmatprep.subr.mxu0 %v372
    %v374 = vand.u32 %v89, 4294901760
    %v375 = vsub.f32 %v89, %v374
    %v376 = vand.u32 %v375, 4294901760
    %v377 = vsub.f32 %v375, %v376
    %v378 = vand.u32 %v377, 4294901760
    %379 = vmatpush1.msra.mxu0 %v378
    %v380 = vand.u32 %v77, 4294901760
    %v381 = vsub.f32 %v77, %v380
    %v382 = vand.u32 %v381, 4294901760
    %v383 = vsub.f32 %v381, %v382
    %v384 = vand.u32 %v383, 4294901760
    %385 = vmatprep.subr.mxu0 %v384
    %v386 = vand.u32 %v76, 4294901760
    %v387 = vsub.f32 %v76, %v386
    %v388 = vand.u32 %v387, 4294901760
    %v389 = vsub.f32 %v387, %v388
    %v390 = vand.u32 %v389, 4294901760
    %391 = vmatpush1.msra.mxu0 %v390
    %v392 = vand.u32 %v64, 4294901760
    %v393 = vsub.f32 %v64, %v392
    %v394 = vand.u32 %v393, 4294901760
    %v395 = vsub.f32 %v393, %v394
    %v396 = vand.u32 %v395, 4294901760
    %397 = vmatprep.subr.mxu0 %v396
    %v398 = vand.u32 %v63, 4294901760
    %v399 = vsub.f32 %v63, %v398
    %v400 = vand.u32 %v399, 4294901760
    %v401 = vsub.f32 %v399, %v400
    %v402 = vand.u32 %v401, 4294901760
    %403 = vmatpush1.msra.mxu0 %v402
    %404 = vmatprep.subr.mxu0 0.0
    %405 = vmatpush2.msra.mxu0 0.0
    %406 = vmatprep.subr.mxu0 0.0
    %407 = vmatpush2.msra.mxu0 0.0
    %408 = vmatprep.subr.mxu0 0.0
    %409 = vmatpush2.msra.mxu0 0.0
    %410 = vmatprep.subr.mxu0 0.0
    %411 = vmatpush2.msra.mxu0 0.0
    %412 = vmatprep.subr.mxu0 0.0
    %413 = vmatpush2.msra.mxu0 0.0
    %414 = vmatprep.subr.mxu0 0.0
    %415 = vmatpush2.msra.mxu0 0.0
    %416 = vmatprep.subr.mxu0 0.0
    %417 = vmatpush2.msra.mxu0 0.0
    %418 = vmatprep.subr.mxu0 0.0
    %419 = vmatpush2.msra.mxu0 0.0
    %420 = vmatprep.subr.mxu0 0.0
    %421 = vmatpush2.msra.mxu0 0.0
    %422 = vmatprep.subr.mxu0 0.0
    %423 = vmatpush2.msra.mxu0 0.0
    %424 = vmatprep.subr.mxu0 0.0
    %425 = vmatpush2.msra.mxu0 0.0
    %426 = vmatprep.subr.mxu0 0.0
    %427 = vmatpush2.msra.mxu0 0.0
    %428 = vmatprep.subr.mxu0 0.0
    %429 = vmatpush2.msra.mxu0 0.0
    %430 = vmatprep.subr.mxu0 0.0
    %431 = vmatpush2.msra.mxu0 0.0
    %432 = vmatprep.subr.mxu0 0.0
    %433 = vmatpush2.msra.mxu0 0.0
    %434 = vmatprep.subr.mxu0 0.0
    %435 = vmatpush2.msra.mxu0 0.0
    %436 = vmatprep.mubr.f32.mxu0 0.0
    %v437 = vand.u32 %v172, 4294901760
    %438 = vmatmul.mubr.f32.gmra.mxu0 %v437
    %v439 = vpop.f32.mrf.mxu0
    %v440 = vadd.f32 %v267, %v439
    %v441 = vpop.f32.mrf.mxu0
    %v442 = vadd.f32 %v269, %v441
    %443 = vmatprep.mubr.f32.mxu0 0.0
    %v444 = vand.u32 %v175, 4294901760
    %445 = vmatmul.mubr.f32.gmra.mxu0 %v444
    %v446 = vpop.f32.mrf.mxu0
    %v447 = vadd.f32 %v278, %v446
    %v448 = vpop.f32.mrf.mxu0
    %v449 = vadd.f32 %v280, %v448
    %450 = vdwg.mxu0
    %451 = vmatprep.subr.mxu0 0.0
    %452 = vmatpush1.msra.mxu0 0.0
    %453 = vmatprep.subr.mxu0 0.0
    %454 = vmatpush1.msra.mxu0 0.0
    %455 = vmatprep.subr.mxu0 0.0
    %456 = vmatpush1.msra.mxu0 0.0
    %457 = vmatprep.subr.mxu0 0.0
    %458 = vmatpush1.msra.mxu0 0.0
    %459 = vmatprep.subr.mxu0 0.0
    %460 = vmatpush1.msra.mxu0 0.0
    %461 = vmatprep.subr.mxu0 0.0
    %462 = vmatpush1.msra.mxu0 0.0
    %463 = vmatprep.subr.mxu0 0.0
    %464 = vmatpush1.msra.mxu0 0.0
    %v465 = vand.u32 %v155, 4294901760
    %v466 = vsub.f32 %v155, %v465
    %467 = vmatprep.subr.mxu0 %v466
    %v468 = vand.u32 %v154, 4294901760
    %v469 = vsub.f32 %v154, %v468
    %470 = vmatpush1.msra.mxu0 %v469
    %v471 = vand.u32 %v142, 4294901760
    %v472 = vsub.f32 %v142, %v471
    %473 = vmatprep.subr.mxu0 %v472
    %v474 = vand.u32 %v141, 4294901760
    %v475 = vsub.f32 %v141, %v474
    %476 = vmatpush1.msra.mxu0 %v475
    %v477 = vand.u32 %v129, 4294901760
    %v478 = vsub.f32 %v129, %v477
    %479 = vmatprep.subr.mxu0 %v478
    %v480 = vand.u32 %v128, 4294901760
    %v481 = vsub.f32 %v128, %v480
    %482 = vmatpush1.msra.mxu0 %v481
    %v483 = vand.u32 %v116, 4294901760
    %v484 = vsub.f32 %v116, %v483
    %485 = vmatprep.subr.mxu0 %v484
    %v486 = vand.u32 %v115, 4294901760
    %v487 = vsub.f32 %v115, %v486
    %488 = vmatpush1.msra.mxu0 %v487
    %v489 = vand.u32 %v30, 4294901760
    %v490 = vsub.f32 %v30, %v489
    %491 = vmatprep.subr.mxu0 %v490
    %v492 = vand.u32 %v29, 4294901760
    %v493 = vsub.f32 %v29, %v492
    %494 = vmatpush1.msra.mxu0 %v493
    %v495 = vand.u32 %v103, 4294901760
    %v496 = vsub.f32 %v103, %v495
    %497 = vmatprep.subr.mxu0 %v496
    %v498 = vand.u32 %v102, 4294901760
    %v499 = vsub.f32 %v102, %v498
    %500 = vmatpush1.msra.mxu0 %v499
    %v501 = vand.u32 %v90, 4294901760
    %v502 = vsub.f32 %v90, %v501
    %503 = vmatprep.subr.mxu0 %v502
    %v504 = vand.u32 %v89, 4294901760
    %v505 = vsub.f32 %v89, %v504
    %506 = vmatpush1.msra.mxu0 %v505
    %v507 = vand.u32 %v77, 4294901760
    %v508 = vsub.f32 %v77, %v507
    %509 = vmatprep.subr.mxu0 %v508
    %v510 = vand.u32 %v76, 4294901760
    %v511 = vsub.f32 %v76, %v510
    %512 = vmatpush1.msra.mxu0 %v511
    %v513 = vand.u32 %v64, 4294901760
    %v514 = vsub.f32 %v64, %v513
    %515 = vmatprep.subr.mxu0 %v514
    %v516 = vand.u32 %v63, 4294901760
    %v517 = vsub.f32 %v63, %v516
    %518 = vmatpush1.msra.mxu0 %v517
    %519 = vmatprep.subr.mxu0 0.0
    %520 = vmatpush2.msra.mxu0 0.0
    %521 = vmatprep.subr.mxu0 0.0
    %522 = vmatpush2.msra.mxu0 0.0
    %523 = vmatprep.subr.mxu0 0.0
    %524 = vmatpush2.msra.mxu0 0.0
    %525 = vmatprep.subr.mxu0 0.0
    %526 = vmatpush2.msra.mxu0 0.0
    %527 = vmatprep.subr.mxu0 0.0
    %528 = vmatpush2.msra.mxu0 0.0
    %529 = vmatprep.subr.mxu0 0.0
    %530 = vmatpush2.msra.mxu0 0.0
    %531 = vmatprep.subr.mxu0 0.0
    %532 = vmatpush2.msra.mxu0 0.0
    %533 = vmatprep.subr.mxu0 0.0
    %534 = vmatpush2.msra.mxu0 0.0
    %535 = vmatprep.subr.mxu0 0.0
    %536 = vmatpush2.msra.mxu0 0.0
    %537 = vmatprep.subr.mxu0 0.0
    %538 = vmatpush2.msra.mxu0 0.0
    %539 = vmatprep.subr.mxu0 0.0
    %540 = vmatpush2.msra.mxu0 0.0
    %541 = vmatprep.subr.mxu0 0.0
    %542 = vmatpush2.msra.mxu0 0.0
    %543 = vmatprep.subr.mxu0 0.0
    %544 = vmatpush2.msra.mxu0 0.0
    %545 = vmatprep.subr.mxu0 0.0
    %546 = vmatpush2.msra.mxu0 0.0
    %547 = vmatprep.subr.mxu0 0.0
    %548 = vmatpush2.msra.mxu0 0.0
    %549 = vmatprep.subr.mxu0 0.0
    %550 = vmatpush2.msra.mxu0 0.0
    %551 = vmatprep.mubr.f32.mxu0 0.0
    %v552 = vand.u32 %v172, 4294901760
    %v553 = vsub.f32 %v172, %v552
    %554 = vmatmul.mubr.f32.gmra.mxu0 %v553
    %v555 = vpop.f32.mrf.mxu0
    %v556 = vadd.f32 %v440, %v555
    %v557 = vpop.f32.mrf.mxu0
    %v558 = vadd.f32 %v442, %v557
    %559 = vmatprep.mubr.f32.mxu0 0.0
    %v560 = vand.u32 %v175, 4294901760
    %v561 = vsub.f32 %v175, %v560
    %562 = vmatmul.mubr.f32.gmra.mxu0 %v561
    %v563 = vpop.f32.mrf.mxu0
    %v564 = vadd.f32 %v447, %v563
    %v565 = vpop.f32.mrf.mxu0
    %v566 = vadd.f32 %v449, %v565
    %567 = vdwg.mxu0
    %568 = vmatprep.subr.mxu0 0.0
    %569 = vmatpush1.msra.mxu0 0.0
    %570 = vmatprep.subr.mxu0 0.0
    %571 = vmatpush1.msra.mxu0 0.0
    %572 = vmatprep.subr.mxu0 0.0
    %573 = vmatpush1.msra.mxu0 0.0
    %574 = vmatprep.subr.mxu0 0.0
    %575 = vmatpush1.msra.mxu0 0.0
    %576 = vmatprep.subr.mxu0 0.0
    %577 = vmatpush1.msra.mxu0 0.0
    %578 = vmatprep.subr.mxu0 0.0
    %579 = vmatpush1.msra.mxu0 0.0
    %580 = vmatprep.subr.mxu0 0.0
    %581 = vmatpush1.msra.mxu0 0.0
    %v582 = vand.u32 %v155, 4294901760
    %583 = vmatprep.subr.mxu0 %v582
    %v584 = vand.u32 %v154, 4294901760
    %585 = vmatpush1.msra.mxu0 %v584
    %v586 = vand.u32 %v142, 4294901760
    %587 = vmatprep.subr.mxu0 %v586
    %v588 = vand.u32 %v141, 4294901760
    %589 = vmatpush1.msra.mxu0 %v588
    %v590 = vand.u32 %v129, 4294901760
    %591 = vmatprep.subr.mxu0 %v590
    %v592 = vand.u32 %v128, 4294901760
    %593 = vmatpush1.msra.mxu0 %v592
    %v594 = vand.u32 %v116, 4294901760
    %595 = vmatprep.subr.mxu0 %v594
    %v596 = vand.u32 %v115, 4294901760
    %597 = vmatpush1.msra.mxu0 %v596
    %v598 = vand.u32 %v30, 4294901760
    %599 = vmatprep.subr.mxu0 %v598
    %v600 = vand.u32 %v29, 4294901760
    %601 = vmatpush1.msra.mxu0 %v600
    %v602 = vand.u32 %v103, 4294901760
    %603 = vmatprep.subr.mxu0 %v602
    %v604 = vand.u32 %v102, 4294901760
    %605 = vmatpush1.msra.mxu0 %v604
    %v606 = vand.u32 %v90, 4294901760
    %607 = vmatprep.subr.mxu0 %v606
    %v608 = vand.u32 %v89, 4294901760
    %609 = vmatpush1.msra.mxu0 %v608
    %v610 = vand.u32 %v77, 4294901760
    %611 = vmatprep.subr.mxu0 %v610
    %v612 = vand.u32 %v76, 4294901760
    %613 = vmatpush1.msra.mxu0 %v612
    %v614 = vand.u32 %v64, 4294901760
    %615 = vmatprep.subr.mxu0 %v614
    %v616 = vand.u32 %v63, 4294901760
    %617 = vmatpush1.msra.mxu0 %v616
    %618 = vmatprep.subr.mxu0 0.0
    %619 = vmatpush2.msra.mxu0 0.0
    %620 = vmatprep.subr.mxu0 0.0
    %621 = vmatpush2.msra.mxu0 0.0
    %622 = vmatprep.subr.mxu0 0.0
    %623 = vmatpush2.msra.mxu0 0.0
    %624 = vmatprep.subr.mxu0 0.0
    %625 = vmatpush2.msra.mxu0 0.0
    %626 = vmatprep.subr.mxu0 0.0
    %627 = vmatpush2.msra.mxu0 0.0
    %628 = vmatprep.subr.mxu0 0.0
    %629 = vmatpush2.msra.mxu0 0.0
    %630 = vmatprep.subr.mxu0 0.0
    %631 = vmatpush2.msra.mxu0 0.0
    %632 = vmatprep.subr.mxu0 0.0
    %633 = vmatpush2.msra.mxu0 0.0
    %634 = vmatprep.subr.mxu0 0.0
    %635 = vmatpush2.msra.mxu0 0.0
    %636 = vmatprep.subr.mxu0 0.0
    %637 = vmatpush2.msra.mxu0 0.0
    %638 = vmatprep.subr.mxu0 0.0
    %639 = vmatpush2.msra.mxu0 0.0
    %640 = vmatprep.subr.mxu0 0.0
    %641 = vmatpush2.msra.mxu0 0.0
    %642 = vmatprep.subr.mxu0 0.0
    %643 = vmatpush2.msra.mxu0 0.0
    %644 = vmatprep.subr.mxu0 0.0
    %645 = vmatpush2.msra.mxu0 0.0
    %646 = vmatprep.subr.mxu0 0.0
    %647 = vmatpush2.msra.mxu0 0.0
    %648 = vmatprep.subr.mxu0 0.0
    %649 = vmatpush2.msra.mxu0 0.0
    %650 = vmatprep.mubr.f32.mxu0 0.0
    %v651 = vand.u32 %v172, 4294901760
    %v652 = vsub.f32 %v172, %v651
    %v653 = vand.u32 %v652, 4294901760
    %654 = vmatmul.mubr.f32.gmra.mxu0 %v653
    %v655 = vpop.f32.mrf.mxu0
    %v656 = vadd.f32 %v556, %v655
    %v657 = vpop.f32.mrf.mxu0
    %v658 = vadd.f32 %v558, %v657
    %659 = vmatprep.mubr.f32.mxu0 0.0
    %v660 = vand.u32 %v175, 4294901760
    %v661 = vsub.f32 %v175, %v660
    %v662 = vand.u32 %v661, 4294901760
    %663 = vmatmul.mubr.f32.gmra.mxu0 %v662
    %v664 = vpop.f32.mrf.mxu0
    %v665 = vadd.f32 %v564, %v664
    %v666 = vpop.f32.mrf.mxu0
    %v667 = vadd.f32 %v566, %v666
    %668 = vdwg.mxu0
    %669 = vmatprep.subr.mxu0 0.0
    %670 = vmatpush1.msra.mxu0 0.0
    %671 = vmatprep.subr.mxu0 0.0
    %672 = vmatpush1.msra.mxu0 0.0
    %673 = vmatprep.subr.mxu0 0.0
    %674 = vmatpush1.msra.mxu0 0.0
    %675 = vmatprep.subr.mxu0 0.0
    %676 = vmatpush1.msra.mxu0 0.0
    %677 = vmatprep.subr.mxu0 0.0
    %678 = vmatpush1.msra.mxu0 0.0
    %679 = vmatprep.subr.mxu0 0.0
    %680 = vmatpush1.msra.mxu0 0.0
    %681 = vmatprep.subr.mxu0 0.0
    %682 = vmatpush1.msra.mxu0 0.0
    %v683 = vand.u32 %v155, 4294901760
    %v684 = vsub.f32 %v155, %v683
    %v685 = vand.u32 %v684, 4294901760
    %686 = vmatprep.subr.mxu0 %v685
    %v687 = vand.u32 %v154, 4294901760
    %v688 = vsub.f32 %v154, %v687
    %v689 = vand.u32 %v688, 4294901760
    %690 = vmatpush1.msra.mxu0 %v689
    %v691 = vand.u32 %v142, 4294901760
    %v692 = vsub.f32 %v142, %v691
    %v693 = vand.u32 %v692, 4294901760
    %694 = vmatprep.subr.mxu0 %v693
    %v695 = vand.u32 %v141, 4294901760
    %v696 = vsub.f32 %v141, %v695
    %v697 = vand.u32 %v696, 4294901760
    %698 = vmatpush1.msra.mxu0 %v697
    %v699 = vand.u32 %v129, 4294901760
    %v700 = vsub.f32 %v129, %v699
    %v701 = vand.u32 %v700, 4294901760
    %702 = vmatprep.subr.mxu0 %v701
    %v703 = vand.u32 %v128, 4294901760
    %v704 = vsub.f32 %v128, %v703
    %v705 = vand.u32 %v704, 4294901760
    %706 = vmatpush1.msra.mxu0 %v705
    %v707 = vand.u32 %v116, 4294901760
    %v708 = vsub.f32 %v116, %v707
    %v709 = vand.u32 %v708, 4294901760
    %710 = vmatprep.subr.mxu0 %v709
    %v711 = vand.u32 %v115, 4294901760
    %v712 = vsub.f32 %v115, %v711
    %v713 = vand.u32 %v712, 4294901760
    %714 = vmatpush1.msra.mxu0 %v713
    %v715 = vand.u32 %v30, 4294901760
    %v716 = vsub.f32 %v30, %v715
    %v717 = vand.u32 %v716, 4294901760
    %718 = vmatprep.subr.mxu0 %v717
    %v719 = vand.u32 %v29, 4294901760
    %v720 = vsub.f32 %v29, %v719
    %v721 = vand.u32 %v720, 4294901760
    %722 = vmatpush1.msra.mxu0 %v721
    %v723 = vand.u32 %v103, 4294901760
    %v724 = vsub.f32 %v103, %v723
    %v725 = vand.u32 %v724, 4294901760
    %726 = vmatprep.subr.mxu0 %v725
    %v727 = vand.u32 %v102, 4294901760
    %v728 = vsub.f32 %v102, %v727
    %v729 = vand.u32 %v728, 4294901760
    %730 = vmatpush1.msra.mxu0 %v729
    %v731 = vand.u32 %v90, 4294901760
    %v732 = vsub.f32 %v90, %v731
    %v733 = vand.u32 %v732, 4294901760
    %734 = vmatprep.subr.mxu0 %v733
    %v735 = vand.u32 %v89, 4294901760
    %v736 = vsub.f32 %v89, %v735
    %v737 = vand.u32 %v736, 4294901760
    %738 = vmatpush1.msra.mxu0 %v737
    %v739 = vand.u32 %v77, 4294901760
    %v740 = vsub.f32 %v77, %v739
    %v741 = vand.u32 %v740, 4294901760
    %742 = vmatprep.subr.mxu0 %v741
    %v743 = vand.u32 %v76, 4294901760
    %v744 = vsub.f32 %v76, %v743
    %v745 = vand.u32 %v744, 4294901760
    %746 = vmatpush1.msra.mxu0 %v745
    %v747 = vand.u32 %v64, 4294901760
    %v748 = vsub.f32 %v64, %v747
    %v749 = vand.u32 %v748, 4294901760
    %750 = vmatprep.subr.mxu0 %v749
    %v751 = vand.u32 %v63, 4294901760
    %v752 = vsub.f32 %v63, %v751
    %v753 = vand.u32 %v752, 4294901760
    %754 = vmatpush1.msra.mxu0 %v753
    %755 = vmatprep.subr.mxu0 0.0
    %756 = vmatpush2.msra.mxu0 0.0
    %757 = vmatprep.subr.mxu0 0.0
    %758 = vmatpush2.msra.mxu0 0.0
    %759 = vmatprep.subr.mxu0 0.0
    %760 = vmatpush2.msra.mxu0 0.0
    %761 = vmatprep.subr.mxu0 0.0
    %762 = vmatpush2.msra.mxu0 0.0
    %763 = vmatprep.subr.mxu0 0.0
    %764 = vmatpush2.msra.mxu0 0.0
    %765 = vmatprep.subr.mxu0 0.0
    %766 = vmatpush2.msra.mxu0 0.0
    %767 = vmatprep.subr.mxu0 0.0
    %768 = vmatpush2.msra.mxu0 0.0
    %769 = vmatprep.subr.mxu0 0.0
    %770 = vmatpush2.msra.mxu0 0.0
    %771 = vmatprep.subr.mxu0 0.0
    %772 = vmatpush2.msra.mxu0 0.0
    %773 = vmatprep.subr.mxu0 0.0
    %774 = vmatpush2.msra.mxu0 0.0
    %775 = vmatprep.subr.mxu0 0.0
    %776 = vmatpush2.msra.mxu0 0.0
    %777 = vmatprep.subr.mxu0 0.0
    %778 = vmatpush2.msra.mxu0 0.0
    %779 = vmatprep.subr.mxu0 0.0
    %780 = vmatpush2.msra.mxu0 0.0
    %781 = vmatprep.subr.mxu0 0.0
    %782 = vmatpush2.msra.mxu0 0.0
    %783 = vmatprep.subr.mxu0 0.0
    %784 = vmatpush2.msra.mxu0 0.0
    %785 = vmatprep.subr.mxu0 0.0
    %786 = vmatpush2.msra.mxu0 0.0
    %787 = vmatprep.mubr.f32.mxu0 0.0
    %v788 = vand.u32 %v172, 4294901760
    %789 = vmatmul.mubr.f32.gmra.mxu0 %v788
    %v790 = vpop.f32.mrf.mxu0
    %v791 = vadd.f32 %v656, %v790
    %v792 = vpop.f32.mrf.mxu0
    %v793 = vadd.f32 %v658, %v792
    %794 = vmatprep.mubr.f32.mxu0 0.0
    %v795 = vand.u32 %v175, 4294901760
    %796 = vmatmul.mubr.f32.gmra.mxu0 %v795
    %v797 = vpop.f32.mrf.mxu0
    %v798 = vadd.f32 %v665, %v797
    %v799 = vpop.f32.mrf.mxu0
    %v800 = vadd.f32 %v667, %v799
    %801 = vdwg.mxu0
    %802 = vmatprep.subr.mxu0 0.0
    %803 = vmatpush1.msra.mxu0 0.0
    %804 = vmatprep.subr.mxu0 0.0
    %805 = vmatpush1.msra.mxu0 0.0
    %806 = vmatprep.subr.mxu0 0.0
    %807 = vmatpush1.msra.mxu0 0.0
    %808 = vmatprep.subr.mxu0 0.0
    %809 = vmatpush1.msra.mxu0 0.0
    %810 = vmatprep.subr.mxu0 0.0
    %811 = vmatpush1.msra.mxu0 0.0
    %812 = vmatprep.subr.mxu0 0.0
    %813 = vmatpush1.msra.mxu0 0.0
    %814 = vmatprep.subr.mxu0 0.0
    %815 = vmatpush1.msra.mxu0 0.0
    %v816 = vand.u32 %v155, 4294901760
    %817 = vmatprep.subr.mxu0 %v816
    %v818 = vand.u32 %v154, 4294901760
    %819 = vmatpush1.msra.mxu0 %v818
    %v820 = vand.u32 %v142, 4294901760
    %821 = vmatprep.subr.mxu0 %v820
    %v822 = vand.u32 %v141, 4294901760
    %823 = vmatpush1.msra.mxu0 %v822
    %v824 = vand.u32 %v129, 4294901760
    %825 = vmatprep.subr.mxu0 %v824
    %v826 = vand.u32 %v128, 4294901760
    %827 = vmatpush1.msra.mxu0 %v826
    %v828 = vand.u32 %v116, 4294901760
    %829 = vmatprep.subr.mxu0 %v828
    %v830 = vand.u32 %v115, 4294901760
    %831 = vmatpush1.msra.mxu0 %v830
    %v832 = vand.u32 %v30, 4294901760
    %833 = vmatprep.subr.mxu0 %v832
    %v834 = vand.u32 %v29, 4294901760
    %835 = vmatpush1.msra.mxu0 %v834
    %v836 = vand.u32 %v103, 4294901760
    %837 = vmatprep.subr.mxu0 %v836
    %v838 = vand.u32 %v102, 4294901760
    %839 = vmatpush1.msra.mxu0 %v838
    %v840 = vand.u32 %v90, 4294901760
    %841 = vmatprep.subr.mxu0 %v840
    %v842 = vand.u32 %v89, 4294901760
    %843 = vmatpush1.msra.mxu0 %v842
    %v844 = vand.u32 %v77, 4294901760
    %845 = vmatprep.subr.mxu0 %v844
    %v846 = vand.u32 %v76, 4294901760
    %847 = vmatpush1.msra.mxu0 %v846
    %v848 = vand.u32 %v64, 4294901760
    %849 = vmatprep.subr.mxu0 %v848
    %v850 = vand.u32 %v63, 4294901760
    %851 = vmatpush1.msra.mxu0 %v850
    %852 = vmatprep.subr.mxu0 0.0
    %853 = vmatpush2.msra.mxu0 0.0
    %854 = vmatprep.subr.mxu0 0.0
    %855 = vmatpush2.msra.mxu0 0.0
    %856 = vmatprep.subr.mxu0 0.0
    %857 = vmatpush2.msra.mxu0 0.0
    %858 = vmatprep.subr.mxu0 0.0
    %859 = vmatpush2.msra.mxu0 0.0
    %860 = vmatprep.subr.mxu0 0.0
    %861 = vmatpush2.msra.mxu0 0.0
    %862 = vmatprep.subr.mxu0 0.0
    %863 = vmatpush2.msra.mxu0 0.0
    %864 = vmatprep.subr.mxu0 0.0
    %865 = vmatpush2.msra.mxu0 0.0
    %866 = vmatprep.subr.mxu0 0.0
    %867 = vmatpush2.msra.mxu0 0.0
    %868 = vmatprep.subr.mxu0 0.0
    %869 = vmatpush2.msra.mxu0 0.0
    %870 = vmatprep.subr.mxu0 0.0
    %871 = vmatpush2.msra.mxu0 0.0
    %872 = vmatprep.subr.mxu0 0.0
    %873 = vmatpush2.msra.mxu0 0.0
    %874 = vmatprep.subr.mxu0 0.0
    %875 = vmatpush2.msra.mxu0 0.0
    %876 = vmatprep.subr.mxu0 0.0
    %877 = vmatpush2.msra.mxu0 0.0
    %878 = vmatprep.subr.mxu0 0.0
    %879 = vmatpush2.msra.mxu0 0.0
    %880 = vmatprep.subr.mxu0 0.0
    %881 = vmatpush2.msra.mxu0 0.0
    %882 = vmatprep.subr.mxu0 0.0
    %883 = vmatpush2.msra.mxu0 0.0
    %884 = vmatprep.mubr.f32.mxu0 0.0
    %v885 = vand.u32 %v172, 4294901760
    %886 = vmatmul.mubr.f32.gmra.mxu0 %v885
    %v887 = vpop.f32.mrf.mxu0
    %v888 = vadd.f32 %v791, %v887
    %v889 = vpop.f32.mrf.mxu0
    %v890 = vadd.f32 %v793, %v889
    %891 = vmatprep.mubr.f32.mxu0 0.0
    %v892 = vand.u32 %v175, 4294901760
    %893 = vmatmul.mubr.f32.gmra.mxu0 %v892
    %v894 = vpop.f32.mrf.mxu0
    %v895 = vadd.f32 %v798, %v894
    %v896 = vpop.f32.mrf.mxu0
    %v897 = vadd.f32 %v800, %v896
    %898 = vdwg.mxu0
    %v899 = vmax.f32 %v888, 0.0
    %v900 = vmax.f32 %v890, 0.0
    %v901 = vmax.f32 %v895, 0.0
    %v902 = vmax.f32 %v897, 0.0
    %903 = vst [vmem:[#allocation5] sm:$0xff] %v899
    %904 = vst [vmem:[#allocation5 + $0x8] sm:$0xff] %v900
    %905 = vst [vmem:[#allocation5 + $0x10] sm:$0xff] %v901
    %906 = vst [vmem:[#allocation5 + $0x18] sm:$0xff] %v902
    // Predicated region
    $region18: #{tpu_custom_call.1} parent=1 // pred_check
      _
    $region19: #{tpu_custom_call.1} parent=1 // pred_check_branch
      %908 = sbr.rel (0) target = $region21
    $region20: #{tpu_custom_call.1} parent=1 // pred_region
      %s910 = ssub.s32 512, 512
      %911 = vsyncadd [#allocation4], %s910
      %s912 = sshll.u32 [#allocation5], 4
      %s913 = int_to_ptr.vmem [resolvable:$true] %s912
      %918 = dma.vmem_to_hbm [thread:$0]  %s913, 512, %s3, [#allocation4], 256, 256, 16
    $region21: #{tpu_custom_call.1} parent=1 // pred_fallthru
      _
    // Predicated region
    $region22: #{tpu_custom_call.1} parent=1 // pred_check
      _
    $region23: #{tpu_custom_call.1} parent=1 // pred_check_branch
      %920 = sbr.rel (0) target = $region25
    $region24: #{tpu_custom_call.1} parent=1 // pred_region
      %921 = dma.done [#allocation4], 512
    $region25: #{tpu_custom_call.1} parent=1 // pred_fallthru
      _
    %922 = vsyncpa [#allocation3], 1
    %923 = vsyncpa [#allocation4], 1

</llo_original>
